<compile_context>
chip_gen: v7x
topology: tpu7x:2x2x1
jax: 0.10.0
libtpu: 0.0.40
codegen_flags: <defaults>
</compile_context>

<pallas_src>
import functools
import math

import jax
import jax.numpy as jnp
from jax import lax
from jax.experimental import pallas as pl
from jax.experimental.pallas import tpu as pltpu


def _round_up(x, m):
    return ((x + m - 1) // m) * m


def _embed_gather_kernel(ids_ref, emb_hbm, out_ref, buf, sem, *,
                         scale, block_tokens):
    """DMA row-gather embedding lookup for one block of tokens.

    ids_ref : SMEM int32 [padded_tokens]         scalar-prefetched token ids
    emb_hbm : HBM  f32   [vocab, dpad]           embedding table (never copied whole)
    out_ref : VMEM f32   [block_tokens, dpad]    output tile
    buf     : VMEM f32   [2, block_tokens, dpad] double-buffered gather staging
    sem     : DMA sems   [2]                     one semaphore per staging slot
    """
    i = pl.program_id(0)
    n_steps = pl.num_programs(0)

    def issue(step, slot):
        base = step * block_tokens

        @pl.loop(0, block_tokens)
        def _(t):
            row = ids_ref[base + t]
            pltpu.make_async_copy(
                emb_hbm.at[pl.ds(row, 1), :],
                buf.at[slot, pl.ds(t, 1), :],
                sem.at[slot],
            ).start()

    # Prime the pipeline: block 0 is fetched at step 0.
    @pl.when(i == 0)
    def _():
        issue(0, 0)

    slot = lax.rem(i, 2)

    # Prefetch the NEXT block into the other slot before waiting on this one,
    # so its HBM reads overlap with this block's wait/scale/store.
    @pl.when(i + 1 < n_steps)
    def _():
        issue(i + 1, 1 - slot)

    # Wait for all row copies of the current block.  All copies of a block
    # share sem[slot]; each wait decrements one row's worth.
    @pl.loop(0, block_tokens)
    def _(t):
        row = ids_ref[i * block_tokens + t]
        pltpu.make_async_copy(
            emb_hbm.at[pl.ds(row, 1), :],
            buf.at[slot, pl.ds(t, 1), :],
            sem.at[slot],
        ).wait()

    # Single full-tile scale -> lane-dense unmasked stores.
    out_ref[...] = (buf[slot] * scale).astype(out_ref.dtype)


def input_embeddings(ids, emb_table, d_model, *, block_tokens=256):
    """ids: int32 (B, S); emb_table: f32 (vocab, d_model) -> f32 (B, S, d_model)."""
    B, S = ids.shape
    vocab, d = emb_table.shape
    assert d == d_model

    num_tokens = B * S

    # Lane-dense output: pad the feature dim to a multiple of 128 so stores are
    # full unmasked vst's instead of masked partial stores.
    dpad = _round_up(d, 128)
    table = emb_table if dpad == d else jnp.pad(emb_table, ((0, 0), (0, dpad - d)))

    # Block sizing: multiple of 8 sublanes, never larger than the padded
    # problem, and at least 2 grid steps (when possible) so the manual
    # double-buffered prefetch actually overlaps.
    max_block = _round_up(num_tokens, 8)
    bt = max(8, min(block_tokens, max_block))
    if max_block // bt < 2 and max_block >= 16:
        bt = max(8, _round_up(max_block // 2, 8))
    padded_tokens = _round_up(num_tokens, bt)
    n_steps = padded_tokens // bt

    # Clamp ids so a bad index can never issue an OOB DMA; pad the tail with 0.
    ids_flat = jnp.clip(ids.reshape(num_tokens).astype(jnp.int32), 0, vocab - 1)
    if padded_tokens != num_tokens:
        ids_flat = jnp.concatenate(
            [ids_flat, jnp.zeros((padded_tokens - num_tokens,), jnp.int32)]
        )

    # VMEM budget: 2-slot gather staging + double-buffered output tile + headroom.
    itemsize = jnp.dtype(table.dtype).itemsize
    vmem_needed = (
        2 * bt * dpad * itemsize        # gather staging (2 slots)
        + 2 * bt * dpad * itemsize      # double-buffered output tile
        + (2 << 20)                     # headroom
    )
    try:
        vmem_cap = int(pltpu.get_tpu_info().vmem_capacity_bytes)
    except Exception:
        vmem_cap = 64 << 20             # smallest per-TC VMEM (v7x)
    vmem_cap -= 8 << 20                 # leave headroom for the compiler
    if vmem_needed > vmem_cap:
        raise ValueError(
            f"block_tokens={bt} needs {vmem_needed} bytes of VMEM but only "
            f"{vmem_cap} are available; reduce block_tokens.")
    vmem_limit = int(min(max(vmem_needed, 32 << 20), vmem_cap))

    scale = float(math.sqrt(d_model))
    kernel = functools.partial(_embed_gather_kernel, scale=scale, block_tokens=bt)

    out_flat = pl.pallas_call(
        kernel,
        out_shape=jax.ShapeDtypeStruct((padded_tokens, dpad), table.dtype),
        grid_spec=pltpu.PrefetchScalarGridSpec(
            num_scalar_prefetch=1,                     # ids -> SMEM
            grid=(n_steps,),
            in_specs=[
                # embedding table stays in HBM; rows are DMA-gathered manually.
                pl.BlockSpec(memory_space=pl.ANY),
            ],
            out_specs=pl.BlockSpec((bt, dpad), lambda i, ids: (i, 0)),
            scratch_shapes=[
                pltpu.VMEM((2, bt, dpad), table.dtype),  # gather staging
                pltpu.SemaphoreType.DMA((2,)),           # one sem per slot
            ],
        ),
        compiler_params=pltpu.CompilerParams(
            # Manual double-buffer carries DMA state across steps -> sequential.
            dimension_semantics=("arbitrary",),
            vmem_limit_bytes=vmem_limit,
        ),
    )(ids_flat, table)

    return out_flat[:num_tokens, :d].reshape(B, S, d)


if __name__ == "__main__":
    # Small, module-consistent shapes.
    d_model = 128
    vocab_size = 32
    batch, seq = 2, 8

    key = jax.random.PRNGKey(0)
    k_emb, k_ids = jax.random.split(key)

    # nn.Embedding default init: N(0, 1)
    emb_table = jax.random.normal(k_emb, (vocab_size, d_model), dtype=jnp.float32)
    ids = jax.random.randint(k_ids, (batch, seq), 0, vocab_size, dtype=jnp.int32)

    out = input_embeddings(ids, emb_table, d_model)
    out = jax.block_until_ready(out)

    # Pure-JAX reference check.
    ref = jnp.take(emb_table, ids, axis=0) * jnp.float32(math.sqrt(d_model))
    assert out.shape == (batch, seq, d_model)
    assert jnp.allclose(out, ref, atol=1e-5, rtol=1e-5), "mismatch vs reference"

    print("KERNEL_OK")
</pallas_src>

<mosaic_0001>
module attributes {stable_mosaic.version = 11 : i64} {
  func.func @_embed_gather_kernel(%arg0: i32, %arg1: memref<16xi32, #tpu.memory_space<smem>>, %arg2: memref<32x128xf32, #tpu.memory_space<any>>, %arg3: memref<8x128xf32, #tpu.memory_space<vmem>>, %arg4: memref<2x8x128xf32, #tpu.memory_space<vmem>>, %arg5: memref<2x!tpu.dma_semaphore, #tpu.memory_space<semaphore_mem>>) attributes {dimension_semantics = [#tpu.dimension_semantics<arbitrary>], iteration_bounds = array<i64: 2>, scalar_prefetch = 1 : i64, scratch_operands = 2 : i64, tpu.core_type = #tpu.core_type<tc>, window_params = [{}, {transform_indices = @transform_1, window_bounds = array<i64: 8, 128>}]} {
    %c0_i32 = arith.constant 0 : i32
    %0 = arith.cmpi eq, %arg0, %c0_i32 : i32
    %1 = arith.extui %0 : i1 to i32
    %c0_i32_0 = arith.constant 0 : i32
    %2 = arith.cmpi ne, %1, %c0_i32_0 : i32
    scf.if %2 {
      %c0_i32_9 = arith.constant 0 : i32
      %c8_i32_10 = arith.constant 8 : i32
      %15 = arith.addi %c0_i32_9, %c8_i32_10 : i32
      %c1_i32_11 = arith.constant 1 : i32
      scf.for %arg6 = %c0_i32_9 to %15 step %c1_i32_11  : i32 {
        %c1_i32_13 = arith.constant 1 : i32
        %16 = arith.muli %arg6, %c1_i32_13 : i32
        %c0_i32_14 = arith.constant 0 : i32
        %17 = arith.addi %c0_i32_14, %16 : i32
        %c0_i32_15 = arith.constant 0 : i32
        %18 = arith.addi %c0_i32_15, %17 : i32
        %19 = arith.index_cast %18 : i32 to index
        %20 = memref.load %arg1[%19] : memref<16xi32, #tpu.memory_space<smem>>
        %c0_i32_16 = arith.constant 0 : i32
        %c0_i32_17 = arith.constant 0 : i32
        %c0_i32_18 = arith.constant 0 : i32
        %21 = tpu.memref_slice %arg2[%20, %c0_i32_18] : memref<32x128xf32, #tpu.memory_space<any>> -> memref<1x128xf32, #tpu.memory_space<any>>
        %c0_i32_19 = arith.constant 0 : i32
        %22 = tpu.memref_slice %arg4[%c0_i32_16, %17, %c0_i32_19] : memref<2x8x128xf32, #tpu.memory_space<vmem>> -> memref<1x1x128xf32, #tpu.memory_space<vmem>>
        %23 = tpu.memref_squeeze %22 : memref<1x1x128xf32, #tpu.memory_space<vmem>> -> memref<1x128xf32, #tpu.memory_space<vmem>>
        %24 = tpu.memref_slice %arg5[%c0_i32_17] : memref<2x!tpu.dma_semaphore, #tpu.memory_space<semaphore_mem>> -> memref<1x!tpu.dma_semaphore, #tpu.memory_space<semaphore_mem>>
        %25 = tpu.memref_squeeze %24 : memref<1x!tpu.dma_semaphore, #tpu.memory_space<semaphore_mem>> -> memref<!tpu.dma_semaphore, #tpu.memory_space<semaphore_mem>>
        tpu.enqueue_dma source(%21 : memref<1x128xf32, #tpu.memory_space<any>>) target(%23 : memref<1x128xf32, #tpu.memory_space<vmem>>) target_semaphore(%25 : memref<!tpu.dma_semaphore, #tpu.memory_space<semaphore_mem>>)
      }
      %c8_i32_12 = arith.constant 8 : i32
    } else {
    }
    %c2_i32 = arith.constant 2 : i32
    %3 = arith.remsi %arg0, %c2_i32 : i32
    %c1_i32 = arith.constant 1 : i32
    %4 = arith.addi %arg0, %c1_i32 : i32
    %c2_i32_1 = arith.constant 2 : i32
    %5 = arith.cmpi slt, %4, %c2_i32_1 : i32
    %6 = arith.extui %5 : i1 to i32
    %c0_i32_2 = arith.constant 0 : i32
    %7 = arith.cmpi ne, %6, %c0_i32_2 : i32
    scf.if %7 {
      %c1_i32_9 = arith.constant 1 : i32
      %15 = arith.addi %arg0, %c1_i32_9 : i32
      %c1_i32_10 = arith.constant 1 : i32
      %16 = arith.subi %c1_i32_10, %3 : i32
      %c8_i32_11 = arith.constant 8 : i32
      %17 = arith.muli %15, %c8_i32_11 : i32
      %c0_i32_12 = arith.constant 0 : i32
      %c8_i32_13 = arith.constant 8 : i32
      %18 = arith.addi %c0_i32_12, %c8_i32_13 : i32
      %c1_i32_14 = arith.constant 1 : i32
      scf.for %arg6 = %c0_i32_12 to %18 step %c1_i32_14  : i32 {
        %c1_i32_16 = arith.constant 1 : i32
        %19 = arith.muli %arg6, %c1_i32_16 : i32
        %c0_i32_17 = arith.constant 0 : i32
        %20 = arith.addi %c0_i32_17, %19 : i32
        %21 = arith.addi %17, %20 : i32
        %22 = arith.index_cast %21 : i32 to index
        %23 = memref.load %arg1[%22] : memref<16xi32, #tpu.memory_space<smem>>
        %c0_i32_18 = arith.constant 0 : i32
        %24 = tpu.memref_slice %arg2[%23, %c0_i32_18] : memref<32x128xf32, #tpu.memory_space<any>> -> memref<1x128xf32, #tpu.memory_space<any>>
        %c0_i32_19 = arith.constant 0 : i32
        %25 = tpu.memref_slice %arg4[%16, %20, %c0_i32_19] : memref<2x8x128xf32, #tpu.memory_space<vmem>> -> memref<1x1x128xf32, #tpu.memory_space<vmem>>
        %26 = tpu.memref_squeeze %25 : memref<1x1x128xf32, #tpu.memory_space<vmem>> -> memref<1x128xf32, #tpu.memory_space<vmem>>
        %27 = tpu.memref_slice %arg5[%16] : memref<2x!tpu.dma_semaphore, #tpu.memory_space<semaphore_mem>> -> memref<1x!tpu.dma_semaphore, #tpu.memory_space<semaphore_mem>>
        %28 = tpu.memref_squeeze %27 : memref<1x!tpu.dma_semaphore, #tpu.memory_space<semaphore_mem>> -> memref<!tpu.dma_semaphore, #tpu.memory_space<semaphore_mem>>
        tpu.enqueue_dma source(%24 : memref<1x128xf32, #tpu.memory_space<any>>) target(%26 : memref<1x128xf32, #tpu.memory_space<vmem>>) target_semaphore(%28 : memref<!tpu.dma_semaphore, #tpu.memory_space<semaphore_mem>>)
      }
      %c8_i32_15 = arith.constant 8 : i32
    } else {
    }
    %c0_i32_3 = arith.constant 0 : i32
    %c8_i32 = arith.constant 8 : i32
    %8 = arith.addi %c0_i32_3, %c8_i32 : i32
    %c1_i32_4 = arith.constant 1 : i32
    scf.for %arg6 = %c0_i32_3 to %8 step %c1_i32_4  : i32 {
      %c1_i32_9 = arith.constant 1 : i32
      %15 = arith.muli %arg6, %c1_i32_9 : i32
      %c0_i32_10 = arith.constant 0 : i32
      %16 = arith.addi %c0_i32_10, %15 : i32
      %c8_i32_11 = arith.constant 8 : i32
      %17 = arith.muli %arg0, %c8_i32_11 : i32
      %18 = arith.addi %17, %16 : i32
      %19 = arith.index_cast %18 : i32 to index
      %20 = memref.load %arg1[%19] : memref<16xi32, #tpu.memory_space<smem>>
      %c0_i32_12 = arith.constant 0 : i32
      %21 = tpu.memref_slice %arg2[%20, %c0_i32_12] : memref<32x128xf32, #tpu.memory_space<any>> -> memref<1x128xf32, #tpu.memory_space<any>>
      %c0_i32_13 = arith.constant 0 : i32
      %22 = tpu.memref_slice %arg4[%3, %16, %c0_i32_13] : memref<2x8x128xf32, #tpu.memory_space<vmem>> -> memref<1x1x128xf32, #tpu.memory_space<vmem>>
      %23 = tpu.memref_squeeze %22 : memref<1x1x128xf32, #tpu.memory_space<vmem>> -> memref<1x128xf32, #tpu.memory_space<vmem>>
      %24 = tpu.memref_slice %arg5[%3] : memref<2x!tpu.dma_semaphore, #tpu.memory_space<semaphore_mem>> -> memref<1x!tpu.dma_semaphore, #tpu.memory_space<semaphore_mem>>
      %25 = tpu.memref_squeeze %24 : memref<1x!tpu.dma_semaphore, #tpu.memory_space<semaphore_mem>> -> memref<!tpu.dma_semaphore, #tpu.memory_space<semaphore_mem>>
      tpu.wait_dma2 semaphore(%25 : memref<!tpu.dma_semaphore, #tpu.memory_space<semaphore_mem>>) src(%21 : memref<1x128xf32, #tpu.memory_space<any>>) dst(%23 : memref<1x128xf32, #tpu.memory_space<vmem>>)
    }
    %c8_i32_5 = arith.constant 8 : i32
    %9 = arith.index_cast %3 : i32 to index
    %c0 = arith.constant 0 : index
    %c0_6 = arith.constant 0 : index
    %10 = vector.load %arg4[%9, %c0, %c0_6] : memref<2x8x128xf32, #tpu.memory_space<vmem>>, vector<1x8x128xf32>
    %11 = vector.shape_cast %10 : vector<1x8x128xf32> to vector<8x128xf32>
    %cst = arith.constant 11.3137083 : f32
    %12 = vector.broadcast %cst : f32 to vector<8x128xf32>
    %13 = arith.mulf %11, %12 : vector<8x128xf32>
    %c0_7 = arith.constant 0 : index
    %c0_8 = arith.constant 0 : index
    %14 = vector.load %arg3[%c0_7, %c0_8] : memref<8x128xf32, #tpu.memory_space<vmem>>, vector<8x128xf32>
    tpu.vector_store %arg3[%c0_7, %c0_8], %13 {strides = array<i32>} : memref<8x128xf32, #tpu.memory_space<vmem>>, vector<8x128xf32>,
    return
  }
  func.func @transform_1(%arg0: i32, %arg1: memref<16xi32, #tpu.memory_space<smem>>) -> (i32, i32) {
    %c0_i32 = arith.constant 0 : i32
    %c0_i32_0 = arith.constant 0 : i32
    return %arg0, %c0_i32 : i32, i32
  }
}

</mosaic_0001>

<llo_original>
// kernel: tpu_custom_call.1
$region0: #{tpu_custom_call.1}
  #allocation0 [shape = 'u32[]', space=smem, size = 0x4, offset = 0x4, fixed_abs, tag = 'smem constant byte address 0x4 - core index']
  #allocation1 [shape = 'u32[144,128]{1,0:T(1,128)}', space=vmem, size = 0x12000, scoped, tag = 'internal scratch']
  #allocation2 [shape = 'f32[2,8,128]{2,1,0:T(8,128)}', space=vmem, size = 0x2000, scoped, tag = 'scratch operand']
  #allocation3 [shape = 's32[2]{0}', space=sflag, size = 0x8, scoped, tag = 'scratch operand']
  #allocation4 [shape = 's32[1]{0}', space=sflag, size = 0x4, scoped, tag = 'scoped memory for tpu_custom_call.1']
  #allocation5 [shape = 'u8[512]{0}', space=smem, size = 0x200, scoped, tag = 'prefetched SMEM operand 0']
  #allocation8 [shape = 's32[]', space=sflag, size = 0x4, offset = 0, fixed_abs, tag = 'sflag constant byte address 0x0 - dummy sync flag']
  #allocation9 [shape = 's32[]', space=sflag, size = 0x4, offset = 0, fixed_abs, tag = 'sflag constant byte address 0x0 - dummy sync flag']
  #allocation10 [shape = 'u32[]', space=smem, size = 0x4, offset = 0x44, fixed_abs, tag = 'smem constant byte address 0x44 - assertion arg 0']
  #allocation11 [shape = 'u32[]', space=smem, size = 0x4, offset = 0x48, fixed_abs, tag = 'smem constant byte address 0x48 - assertion arg 1']
  #allocation12 [shape = 's32[]', space=sflag, size = 0x4, offset = 0, fixed_abs, tag = 'sflag constant byte address 0x0 - dummy sync flag']
  #allocation13 [shape = 's32[]', space=sflag, size = 0x4, offset = 0, fixed_abs, tag = 'sflag constant byte address 0x0 - dummy sync flag']
  %s0 = inlined_call_operand.hbm [shape: s32[16], index: 0, kind: input, shape index: {}]
  %s1 = inlined_call_operand.hbm [shape: f32[32,128], index: 1, kind: input, shape index: {}]
  %s2 = inlined_call_operand.hbm [shape: f32[16,128], index: 2, kind: output, shape index: {}]
  %s3 = sld [smem:[#allocation0]]
  $region62: #{tpu_custom_call.1} parent=0
    _
  %s5 = ssub.s32 1, %s3
  %s6 = scalar_select 0, %s5, %s3
  %8 = dma.hbm_to_smem %s0, 16, [#allocation5], [#allocation4]
  %9 = dma.done [#allocation4], 16
  %10 = sfence
  $region1: #{tpu_custom_call.1} parent=0
    #allocation6 [shape = 'u8[8192]{0}', space=vmem, size = 0x2000, scoped, tag = 'output window, operand 0']
    #allocation7 [shape = 's32[2]{0}', space=sflag, size = 0x8, scoped, tag = 'scoped memory for tpu_custom_call.1']
    %11 = vsyncpa [#allocation7], 0
    %s12 = scalar_lea.sflag [#allocation7], 1
    %13 = vsyncpa %s12, 0
    loop: start=0, step=1, limit=3
    $region2: #{tpu_custom_call.1} parent=1 // loop_pre_header
      _
    $region3: #{tpu_custom_call.1} parent=1 // loop_header
      %s15 = sphi 0, %s19
      %p16 = scmp.ge.s32.totalorder %s15, 3
      %s24 = sphi 0, %s26
      %s27 = sphi 0, %s24
      %s37 = sphi 0, %s27
    $region4: #{tpu_custom_call.1} parent=1 // loop_header_branch
      %18 = sbr.rel (%p16) target = $region8
    $region5: #{tpu_custom_call.1} parent=1 // loop_body
      %s20 = ssub.s32 %s15, 1
      %s21 = sadd.s32 %s15, 1
      %s22 = ssub.s32 %s15, %s21
      %p23 = scmp.eq.s32.totalorder %s22, 0
      %s25 = sadd.s32 %s24, 1
      %s26 = scalar_select %p23, %s24, %s25
      %p28 = pneg %p23
      %p29 = scmp.eq.s32.totalorder %s15, 1
      %p30 = por %p28, %p29
      %p31 = scmp.ne.s32.totalorder %s24, %s27
      %p32 = scmp.eq.s32.totalorder %s15, 0
      %p33 = por %p31, %p32
      %p34 = scmp.ne.s32.totalorder %s24, %s27
      %p35 = scmp.eq.s32.totalorder %s20, 1
      %p36 = por %p34, %p35
      %p38 = scmp.ne.s32.totalorder %s27, %s37
      %p39 = scmp.eq.s32.totalorder %s20, 0
      %p40 = por %p38, %p39
      %p41 = scmp.lt.s32.totalorder %s15, 2
      // Predicated region
      $region9: #{tpu_custom_call.1} parent=5 // pred_check
        %p42 = pneg %p41
      $region10: #{tpu_custom_call.1} parent=5 // pred_check_branch
        %44 = sbr.rel (%p42) target = $region12
      $region11: #{tpu_custom_call.1} parent=5 // pred_region
        %p45 = pneg %p33
        %p46 = pneg %p30
        %s47 = sand.u32 %s24, 1
        %s48 = scalar_lea.sflag [#allocation7], %s47
        %s49 = sand.u32 %s24, 1
        %s50 = smul.addr %s49, 8
        %s51 = scalar_lea.vmem [#allocation6], %s50
        %p52 = scmp.eq.s32.totalorder %s15, 0
        // Predicated region
        $region13: #{tpu_custom_call.1} parent=11 // pred_check
          %p53 = pneg %p52
        $region14: #{tpu_custom_call.1} parent=11 // pred_check_branch
          %55 = sbr.rel (%p53) target = $region16
        $region15: #{tpu_custom_call.1} parent=11 // pred_region
          loop: start=0, step=1, limit=8
          $region17: #{tpu_custom_call.1} parent=15 // loop_pre_header
            _
          $region18: #{tpu_custom_call.1} parent=15 // loop_header
            %s57 = sphi 0, %s61
            %p58 = scmp.ge.s32.totalorder %s57, 8
          $region19: #{tpu_custom_call.1} parent=15 // loop_header_branch
            %60 = sbr.rel (%p58) target = $region23
          $region20: #{tpu_custom_call.1} parent=15 // loop_body
            %s62 = sld [smem:[#allocation5 + %s57]]
            %s63 = smul.addr %s62, 16
            %s64 = scalar_lea.hbm %s1, %s63
            %s65 = scalar_lea.vmem [#allocation2], %s57
            // Predicated region
            $region24: #{tpu_custom_call.1} parent=20 // pred_check
              _
            $region25: #{tpu_custom_call.1} parent=20 // pred_check_branch
              %67 = sbr.rel target = $region27
            $region26: #{tpu_custom_call.1} parent=20 // pred_region
              %68 = sst [smem:[#allocation10]] [#allocation9]
              %69 = sst [smem:[#allocation11]] [#allocation8]
            $region27: #{tpu_custom_call.1} parent=20 // pred_fallthru
              _
            %71 = shalt.err (0)
            %s73 = sshll.u32 %s65, 4
            %s74 = int_to_ptr.vmem [resolvable:$true] %s73
            %76 = dma.hbm_to_vmem [thread:$0]  %s64, 16, %s74, [#allocation3]
          $region21: #{tpu_custom_call.1} parent=15 // loop_footer
            %s61 = sadd.s32 1, %s57
          $region22: #{tpu_custom_call.1} parent=15 // loop_footer_branch
            %56 = sbr.rel target = $region18
          $region23: #{tpu_custom_call.1} parent=15 // loop_exit
            _
        $region16: #{tpu_custom_call.1} parent=11 // pred_fallthru
          _
        %p77 = scmp.lt.s32.totalorder %s15, 0
        %s78 = ssub.s32 0, %s15
        %s79 = scalar_select %p77, %s78, %s15
        %s80 = sand.u32 %s79, 1
        %s81 = ssub.s32 0, %s80
        %s82 = scalar_select %p77, %s81, %s80
        %s83 = sadd.s32 %s15, 1
        %p84 = scmp.lt.s32.totalorder %s83, 2
        // Predicated region
        $region28: #{tpu_custom_call.1} parent=11 // pred_check
          %p85 = pneg %p84
        $region29: #{tpu_custom_call.1} parent=11 // pred_check_branch
          %87 = sbr.rel (%p85) target = $region31
        $region30: #{tpu_custom_call.1} parent=11 // pred_region
          %s88 = ssub.s32 1, %s82
          %s89 = smul.u32 %s83, 8
          loop: start=0, step=1, limit=8
          $region32: #{tpu_custom_call.1} parent=30 // loop_pre_header
            _
          $region33: #{tpu_custom_call.1} parent=30 // loop_header
            %s91 = sphi 0, %s95
            %p92 = scmp.ge.s32.totalorder %s91, 8
          $region34: #{tpu_custom_call.1} parent=30 // loop_header_branch
            %94 = sbr.rel (%p92) target = $region38
          $region35: #{tpu_custom_call.1} parent=30 // loop_body
            %s96 = sadd.s32 %s89, %s91
            %s97 = sld [smem:[#allocation5 + %s96]]
            %s98 = smul.addr %s97, 16
            %s99 = scalar_lea.hbm %s1, %s98
            %s100 = smul.u32 %s88, 8
            %s101 = sadd.s32 %s91, %s100
            %s102 = scalar_lea.vmem [#allocation2], %s101
            %s103 = scalar_lea.sflag [#allocation3], %s88
            // Predicated region
            $region39: #{tpu_custom_call.1} parent=35 // pred_check
              _
            $region40: #{tpu_custom_call.1} parent=35 // pred_check_branch
              %105 = sbr.rel target = $region42
            $region41: #{tpu_custom_call.1} parent=35 // pred_region
              %106 = sst [smem:[#allocation10]] [#allocation13]
              %107 = sst [smem:[#allocation11]] [#allocation12]
            $region42: #{tpu_custom_call.1} parent=35 // pred_fallthru
              _
            %109 = shalt.err (0)
            %s111 = sshll.u32 %s102, 4
            %s112 = int_to_ptr.vmem [resolvable:$true] %s111
            %114 = dma.hbm_to_vmem [thread:$0]  %s99, 16, %s112, %s103
          $region36: #{tpu_custom_call.1} parent=30 // loop_footer
            %s95 = sadd.s32 1, %s91
          $region37: #{tpu_custom_call.1} parent=30 // loop_footer_branch
            %90 = sbr.rel target = $region33
          $region38: #{tpu_custom_call.1} parent=30 // loop_exit
            _
        $region31: #{tpu_custom_call.1} parent=11 // pred_fallthru
          _
        loop: start=0, step=1, limit=8
        $region43: #{tpu_custom_call.1} parent=11 // loop_pre_header
          _
        $region44: #{tpu_custom_call.1} parent=11 // loop_header
          %s116 = sphi 0, %s120
          %p117 = scmp.ge.s32.totalorder %s116, 8
        $region45: #{tpu_custom_call.1} parent=11 // loop_header_branch
          %119 = sbr.rel (%p117) target = $region49
        $region46: #{tpu_custom_call.1} parent=11 // loop_body
          %s121 = smul.u32 %s15, 8
          %s122 = sadd.s32 %s121, %s116
          %s123 = sld [smem:[#allocation5 + %s122]]
          %s124 = scalar_lea.sflag [#allocation3], %s82
          %s125 = smul.u32 1, 1
          %s126 = sshll.u32 %s125, 4
          %127 = dma.done %s124, %s126
        $region47: #{tpu_custom_call.1} parent=11 // loop_footer
          %s120 = sadd.s32 1, %s116
        $region48: #{tpu_custom_call.1} parent=11 // loop_footer_branch
          %115 = sbr.rel target = $region44
        $region49: #{tpu_custom_call.1} parent=11 // loop_exit
          _
        %s128 = smul.u32 %s82, 8
        %s129 = scalar_lea.vmem [#allocation2], %s128
        %v130 = vld [vmem:[%s129] sm:$0xff]
        %v131 = vmul.f32 %v130, 11.313708
        %132 = vst [vmem:[%s51] sm:$0xff] %v131
        %s133 = sand.u32 %s24, 1
        %s134 = scalar_lea.sflag [#allocation7], %s133
        %s135 = sand.u32 %s24, 1
        %s136 = smul.addr %s135, 8
        %s137 = scalar_lea.vmem [#allocation6], %s136
        // Predicated region
        $region50: #{tpu_custom_call.1} parent=11 // pred_check
          %p138 = pneg %p30
        $region51: #{tpu_custom_call.1} parent=11 // pred_check_branch
          %140 = sbr.rel (%p138) target = $region53
        $region52: #{tpu_custom_call.1} parent=11 // pred_region
          %s142 = ssub.s32 128, 128
          %143 = vsyncadd %s134, %s142
          %s144 = smul.addr %s15, 128
          %s145 = scalar_lea.hbm %s2, %s144
          %s147 = sshll.u32 %s137, 4
          %s148 = int_to_ptr.vmem [resolvable:$true] %s147
          %150 = dma.vmem_to_hbm [thread:$0]  %s148, 128, %s145, %s134
        $region53: #{tpu_custom_call.1} parent=11 // pred_fallthru
          _
      $region12: #{tpu_custom_call.1} parent=5 // pred_fallthru
        _
      %p151 = scmp.le.s32.totalorder 1, %s15
      // Predicated region
      $region54: #{tpu_custom_call.1} parent=5 // pred_check
        %p152 = pneg %p151
      $region55: #{tpu_custom_call.1} parent=5 // pred_check_branch
        %154 = sbr.rel (%p152) target = $region57
      $region56: #{tpu_custom_call.1} parent=5 // pred_region
        %s155 = ssub.s32 %s15, 1
        // Predicated region
        $region58: #{tpu_custom_call.1} parent=56 // pred_check
          %p156 = pneg %p36
        $region59: #{tpu_custom_call.1} parent=56 // pred_check_branch
          %158 = sbr.rel (%p156) target = $region61
        $region60: #{tpu_custom_call.1} parent=56 // pred_region
          %s159 = sand.u32 %s27, 1
          %s160 = scalar_lea.sflag [#allocation7], %s159
          %s161 = sand.u32 %s27, 1
          %s162 = smul.addr %s161, 8
          %s163 = scalar_lea.vmem [#allocation6], %s162
          %164 = dma.done %s160, 128
        $region61: #{tpu_custom_call.1} parent=56 // pred_fallthru
          _
      $region57: #{tpu_custom_call.1} parent=5 // pred_fallthru
        _
    $region6: #{tpu_custom_call.1} parent=1 // loop_footer
      %s19 = sadd.s32 1, %s15
    $region7: #{tpu_custom_call.1} parent=1 // loop_footer_branch
      %14 = sbr.rel target = $region3
    $region8: #{tpu_custom_call.1} parent=1 // loop_exit
      _
    %165 = vsyncpa [#allocation7], 1
    %s166 = scalar_lea.sflag [#allocation7], 1
    %167 = vsyncpa %s166, 1
  %168 = vsyncmov [#allocation3]
  %s169 = vpop.sfrf %168
  %p170 = scmp.eq.s32.totalorder %s169, 0
  %p171 = pneg %p170
  %173 = shalt.err (%p171)
  %s174 = scalar_lea.sflag [#allocation3], 1
  %175 = vsyncmov %s174
  %s176 = vpop.sfrf %175
  %p177 = scmp.eq.s32.totalorder %s176, 0
  %p178 = pneg %p177
  %180 = shalt.err (%p178)

</llo_original>
